<compile_context>
chip_gen: v6e
topology: v6e:2x2x1
jax: 0.10.0
libtpu: 0.0.40
codegen_flags: <defaults>
</compile_context>

<pallas_src>
import jax
import jax.numpy as jnp
from jax.experimental import pallas as pl
from jax.experimental.pallas import tpu as pltpu


# ----------------------------- Pallas kernel ------------------------------ #
def _up_pad_concat_kernel(x1_ref, x2_ref, ryp_ref, rxpt_ref, out_ref):
    """One (batch, row-block) tile of cat([x2, pad(bilinear_up_2x(x1))], dim=1).

    x1_ref:   (1, C1, H1, W1)   full low-res input for this batch element
    x2_ref:   (1, C2, TH, W2)   skip-connection rows for this output row block
    ryp_ref:  (TH, H1)          row-interp (+ y-pad) matrix, this row block
    rxpt_ref: (W1, W2)          column-interp (+ x-pad) matrix, transposed
    out_ref:  (1, C2 + C1, TH, W2)
    """
    _, C1, H1, W1 = x1_ref.shape
    _, C2, TH, W2 = x2_ref.shape

    # Column (W) interpolation + x-padding: one (C1*H1, W1) @ (W1, W2) matmul.
    x1f = x1_ref[0].astype(jnp.float32).reshape(C1 * H1, W1)
    t = jnp.dot(x1f, rxpt_ref[...], preferred_element_type=jnp.float32)
    t = t.reshape(C1, H1, W2)

    # Row (H) interpolation + y-padding: channel-batched (TH,H1)@(H1,W2) matmul.
    ry_b = jnp.broadcast_to(ryp_ref[...][None, :, :], (C1, TH, H1))
    up = jax.lax.dot_general(
        ry_b, t,
        dimension_numbers=(((2,), (1,)), ((0,), (0,))),
        preferred_element_type=jnp.float32)               # (C1, TH, W2)

    # Fused concat: x2 channels first, upsampled/padded x1 channels after.
    out_ref[0, :C2] = x2_ref[0]
    out_ref[0, C2:] = up.astype(out_ref.dtype)


# ------------------------------ wrapper ------------------------------------ #
def _interp_matrix(n_in, n_out):
    """(n_out, n_in) matrix reproducing torch bilinear resize, align_corners=True."""
    if n_in == 1:
        return jnp.ones((n_out, 1), jnp.float32)
    src = jnp.arange(n_out, dtype=jnp.float32) * ((n_in - 1) / (n_out - 1))
    i0 = jnp.floor(src).astype(jnp.int32)
    i1 = jnp.minimum(i0 + 1, n_in - 1)
    f = src - i0.astype(jnp.float32)
    eye = jnp.eye(n_in, dtype=jnp.float32)
    return eye[i0] * (1.0 - f)[:, None] + eye[i1] * f[:, None]


def _place_rows(m, n_total, offset):
    """Embed rows of `m` into an (n_total, m.shape[1]) zero matrix at `offset`.

    Folds F.pad into the interpolation matrix (offset > 0 pads, < 0 crops)."""
    n_src, n_in = m.shape
    dst0 = max(offset, 0)
    src0 = max(-offset, 0)
    n_copy = max(min(n_src - src0, n_total - dst0), 0)
    out = jnp.zeros((n_total, n_in), m.dtype)
    if n_copy > 0:
        out = out.at[dst0:dst0 + n_copy].set(m[src0:src0 + n_copy])
    return out


def _pick_row_block(h, target=128):
    """Largest TH <= target with h % TH == 0 and TH % 8 == 0 (else full h)."""
    if h <= target:
        return h
    for th in range(target, 0, -1):
        if h % th == 0 and th % 8 == 0:
            return th
    return h


def single_up_forward(x1, x2, *, row_block=128):
    """SingleUp.forward(x1, x2) for dim=2, bilinear=True.  x1, x2 are NCHW."""
    N, C1, H1, W1 = x1.shape
    N2, C2, H2, W2 = x2.shape
    assert N == N2 and x1.dtype == x2.dtype
    Hup, Wup = 2 * H1, 2 * W1                    # nn.Upsample(scale_factor=2)
    diffY, diffX = H2 - Hup, W2 - Wup            # F.pad amounts (may be 0 / <0)

    # Interpolation matrices with F.pad folded in (zero rows/cols for padding).
    ryp = _place_rows(_interp_matrix(H1, Hup), H2, diffY // 2)        # (H2, H1)
    rxpt = _place_rows(_interp_matrix(W1, Wup), W2, diffX // 2).T     # (W1, W2)

    TH = _pick_row_block(H2, row_block)
    grid = (N, H2 // TH)

    return pl.pallas_call(
        _up_pad_concat_kernel,
        out_shape=jax.ShapeDtypeStruct((N, C2 + C1, H2, W2), x2.dtype),
        grid_spec=pltpu.PrefetchScalarGridSpec(
            num_scalar_prefetch=0,
            grid=grid,
            in_specs=[
                pl.BlockSpec((1, C1, H1, W1), lambda n, r: (n, 0, 0, 0)),
                pl.BlockSpec((1, C2, TH, W2), lambda n, r: (n, 0, r, 0)),
                pl.BlockSpec((TH, H1), lambda n, r: (r, 0)),
                pl.BlockSpec((W1, W2), lambda n, r: (0, 0)),
            ],
            out_specs=pl.BlockSpec((1, C2 + C1, TH, W2),
                                   lambda n, r: (n, 0, r, 0)),
        ),
        compiler_params=pltpu.CompilerParams(
            dimension_semantics=("parallel", "parallel")),
    )(x1, x2, ryp, rxpt)


# --------------------------- pure-JAX reference ----------------------------- #
def _reference_single_up(x1, x2):
    """Mirror of the PyTorch forward (gathers are fine outside Pallas)."""
    N, C1, H1, W1 = x1.shape
    _, C2, H2, W2 = x2.shape
    Hup, Wup = 2 * H1, 2 * W1

    def coords(n_in, n_out):
        if n_in == 1:
            z = jnp.zeros((n_out,), jnp.float32)
            return z, z.astype(jnp.int32), z.astype(jnp.int32)
        src = jnp.arange(n_out, dtype=jnp.float32) * ((n_in - 1) / (n_out - 1))
        i0 = jnp.floor(src).astype(jnp.int32)
        return src - i0, i0, jnp.minimum(i0 + 1, n_in - 1)

    fy, y0, y1 = coords(H1, Hup)
    fx, x0, x1i = coords(W1, Wup)
    rows = (x1[:, :, y0, :] * (1 - fy)[None, None, :, None]
            + x1[:, :, y1, :] * fy[None, None, :, None])
    up = (rows[:, :, :, x0] * (1 - fx)[None, None, None, :]
          + rows[:, :, :, x1i] * fx[None, None, None, :])
    diffY, diffX = H2 - Hup, W2 - Wup
    up = jnp.pad(up, ((0, 0), (0, 0),
                      (diffY // 2, diffY - diffY // 2),
                      (diffX // 2, diffX - diffX // 2)))
    return jnp.concatenate([x2, up], axis=1)


if __name__ == "__main__":
    key = jax.random.PRNGKey(0)
    k1, k2 = jax.random.split(key)

    # SingleUp(in_channels=8, out_channels=4, bilinear=True, dim=2):
    # x1 (low-res) and x2 (skip connection); output channels = C2 + C1.
    N, C1, H1, W1 = 2, 4, 8, 8
    C2, H2, W2 = 4, 16, 16
    x1 = jax.random.normal(k1, (N, C1, H1, W1), jnp.float32)
    x2 = jax.random.normal(k2, (N, C2, H2, W2), jnp.float32)

    out = jax.jit(single_up_forward)(x1, x2)
    out = jax.block_until_ready(out)

    assert out.shape == (N, C2 + C1, H2, W2), out.shape
    assert out.dtype == jnp.float32
    assert bool(jnp.all(jnp.isfinite(out)))
    # Loose tolerance: the MXU's default f32 matmul path may round operands to
    # bf16; structural errors (wrong pixel / pad / concat order) would be O(1).
    ref = _reference_single_up(x1, x2)
    assert bool(jnp.allclose(out, ref, atol=5e-2, rtol=5e-2))
    print("KERNEL_OK")
</pallas_src>

<mosaic_0001>
module attributes {stable_mosaic.version = 11 : i64} {
  func.func @_up_pad_concat_kernel(%arg0: i32, %arg1: i32, %arg2: memref<1x4x8x8xf32, #tpu.memory_space<vmem>>, %arg3: memref<1x4x16x16xf32, #tpu.memory_space<vmem>>, %arg4: memref<16x8xf32, #tpu.memory_space<vmem>>, %arg5: memref<8x16xf32, #tpu.memory_space<vmem>>, %arg6: memref<1x8x16x16xf32, #tpu.memory_space<vmem>>) attributes {dimension_semantics = [#tpu.dimension_semantics<parallel>, #tpu.dimension_semantics<parallel>], iteration_bounds = array<i64: 2, 1>, scalar_prefetch = 0 : i64, scratch_operands = 0 : i64, tpu.core_type = #tpu.core_type<tc>, window_params = [{transform_indices = @transform_0, window_bounds = array<i64: 1, 4, 8, 8>}, {transform_indices = @transform_1, window_bounds = array<i64: 1, 4, 16, 16>}, {transform_indices = @transform_2, window_bounds = array<i64: 16, 8>}, {pipeline_mode = #tpu.pipeline_mode<synchronous>, transform_indices = @transform_3, window_bounds = array<i64: 8, 16>}, {transform_indices = @transform_4, window_bounds = array<i64: 1, 8, 16, 16>}]} {
    %c0 = arith.constant 0 : index
    %c0_0 = arith.constant 0 : index
    %c0_1 = arith.constant 0 : index
    %c0_2 = arith.constant 0 : index
    %0 = vector.load %arg2[%c0, %c0_0, %c0_1, %c0_2] : memref<1x4x8x8xf32, #tpu.memory_space<vmem>>, vector<1x4x8x8xf32>
    %1 = vector.shape_cast %0 : vector<1x4x8x8xf32> to vector<4x8x8xf32>
    %2 = vector.shape_cast %1 : vector<4x8x8xf32> to vector<32x8xf32>
    %c0_3 = arith.constant 0 : index
    %c0_4 = arith.constant 0 : index
    %3 = vector.load %arg5[%c0_3, %c0_4] : memref<8x16xf32, #tpu.memory_space<vmem>>, vector<8x16xf32>
    %cst = arith.constant dense<0.000000e+00> : vector<32x16xf32>
    %4 = tpu.matmul %2, %3, %cst {dimension_numbers = #tpu.dot_dimension_numbers<[1], [0], [0], [1], [0, 0, 1, 1], [], []>} : vector<32x8xf32>, vector<8x16xf32>, vector<32x16xf32> -> vector<32x16xf32>
    %5 = vector.shape_cast %4 : vector<32x16xf32> to vector<4x8x16xf32>
    %c0_5 = arith.constant 0 : index
    %c0_6 = arith.constant 0 : index
    %6 = vector.load %arg4[%c0_5, %c0_6] : memref<16x8xf32, #tpu.memory_space<vmem>>, vector<16x8xf32>
    %7 = vector.shape_cast %6 : vector<16x8xf32> to vector<1x16x8xf32>
    %8 = vector.shape_cast %7 : vector<1x16x8xf32> to vector<1x16x8xf32>
    %9 = vector.broadcast %8 : vector<1x16x8xf32> to vector<4x16x8xf32>
    %cst_7 = arith.constant dense<0.000000e+00> : vector<4x16x16xf32>
    %10 = tpu.matmul %9, %5, %cst_7 {dimension_numbers = #tpu.dot_dimension_numbers<[2], [1], [1], [2], [0, 0, 0, 1, 1, 2], [0], [0]>} : vector<4x16x8xf32>, vector<4x8x16xf32>, vector<4x16x16xf32> -> vector<4x16x16xf32>
    %c0_8 = arith.constant 0 : index
    %c0_9 = arith.constant 0 : index
    %c0_10 = arith.constant 0 : index
    %c0_11 = arith.constant 0 : index
    %11 = vector.load %arg3[%c0_8, %c0_9, %c0_10, %c0_11] : memref<1x4x16x16xf32, #tpu.memory_space<vmem>>, vector<1x4x16x16xf32>
    %12 = vector.shape_cast %11 : vector<1x4x16x16xf32> to vector<4x16x16xf32>
    %c0_12 = arith.constant 0 : index
    %c0_13 = arith.constant 0 : index
    %c0_14 = arith.constant 0 : index
    %c0_15 = arith.constant 0 : index
    %13 = vector.load %arg6[%c0_12, %c0_13, %c0_14, %c0_15] : memref<1x8x16x16xf32, #tpu.memory_space<vmem>>, vector<1x4x16x16xf32>
    %14 = vector.shape_cast %13 : vector<1x4x16x16xf32> to vector<4x16x16xf32>
    %15 = vector.shape_cast %12 : vector<4x16x16xf32> to vector<1x4x16x16xf32>
    tpu.vector_store %arg6[%c0_12, %c0_13, %c0_14, %c0_15], %15 {strides = array<i32>} : memref<1x8x16x16xf32, #tpu.memory_space<vmem>>, vector<1x4x16x16xf32>,
    %c0_16 = arith.constant 0 : index
    %c4 = arith.constant 4 : index
    %c0_17 = arith.constant 0 : index
    %c0_18 = arith.constant 0 : index
    %16 = vector.load %arg6[%c0_16, %c4, %c0_17, %c0_18] : memref<1x8x16x16xf32, #tpu.memory_space<vmem>>, vector<1x4x16x16xf32>
    %17 = vector.shape_cast %16 : vector<1x4x16x16xf32> to vector<4x16x16xf32>
    %18 = vector.shape_cast %10 : vector<4x16x16xf32> to vector<1x4x16x16xf32>
    tpu.vector_store %arg6[%c0_16, %c4, %c0_17, %c0_18], %18 {strides = array<i32>} : memref<1x8x16x16xf32, #tpu.memory_space<vmem>>, vector<1x4x16x16xf32>,
    return
  }
  func.func @transform_0(%arg0: i32, %arg1: i32) -> (i32, i32, i32, i32) {
    %c0_i32 = arith.constant 0 : i32
    %c0_i32_0 = arith.constant 0 : i32
    %c0_i32_1 = arith.constant 0 : i32
    %c0_i32_2 = arith.constant 0 : i32
    return %arg0, %c0_i32, %c0_i32_0, %c0_i32_1 : i32, i32, i32, i32
  }
  func.func @transform_1(%arg0: i32, %arg1: i32) -> (i32, i32, i32, i32) {
    %c0_i32 = arith.constant 0 : i32
    %c0_i32_0 = arith.constant 0 : i32
    %c0_i32_1 = arith.constant 0 : i32
    return %arg0, %c0_i32, %arg1, %c0_i32_0 : i32, i32, i32, i32
  }
  func.func @transform_2(%arg0: i32, %arg1: i32) -> (i32, i32) {
    %c0_i32 = arith.constant 0 : i32
    %c0_i32_0 = arith.constant 0 : i32
    return %arg1, %c0_i32 : i32, i32
  }
  func.func @transform_3(%arg0: i32, %arg1: i32) -> (i32, i32) {
    %c0_i32 = arith.constant 0 : i32
    %c0_i32_0 = arith.constant 0 : i32
    %c0_i32_1 = arith.constant 0 : i32
    return %c0_i32, %c0_i32_0 : i32, i32
  }
  func.func @transform_4(%arg0: i32, %arg1: i32) -> (i32, i32, i32, i32) {
    %c0_i32 = arith.constant 0 : i32
    %c0_i32_0 = arith.constant 0 : i32
    %c0_i32_1 = arith.constant 0 : i32
    return %arg0, %c0_i32, %arg1, %c0_i32_0 : i32, i32, i32, i32
  }
}

</mosaic_0001>

<llo_original>
// kernel: single_up_forward.1
$region0: #{single_up_forward.1}
  #allocation0 [shape = 'u32[]', space=smem, size = 0x4, offset = 0x4, fixed_abs, tag = 'smem constant byte address 0x4 - core index']
  #allocation1 [shape = 'u32[144,128]{1,0:T(1,128)}', space=vmem, size = 0x12000, scoped, tag = 'internal scratch']
  %s0 = inlined_call_operand.vmem [shape: f32[2,4,8,8], index: 0, kind: input, shape index: {}]
  %s1 = inlined_call_operand.vmem [shape: f32[2,4,16,16], index: 1, kind: input, shape index: {}]
  %s2 = inlined_call_operand.vmem [shape: f32[16,8], index: 2, kind: input, shape index: {}]
  %s3 = inlined_call_operand.vmem [shape: f32[8,16], index: 3, kind: input, shape index: {}]
  %s4 = inlined_call_operand.hbm [shape: f32[2,8,16,16], index: 4, kind: output, shape index: {}]
  %s5 = sld [smem:[#allocation0]]
  $region49: #{single_up_forward.1} parent=0
    _
  %s7 = ssub.s32 1, %s5
  %s8 = scalar_select 0, %s7, %s5
  $region1: #{single_up_forward.1} parent=0
    #allocation2 [shape = 'u8[131072]{0}', space=vmem, size = 0x20000, scoped, tag = 'output window, operand 0']
    #allocation3 [shape = 's32[2]{0}', space=sflag, size = 0x8, scoped, tag = 'scoped memory for single_up_forward.1']
    %9 = vsyncpa [#allocation3], 0
    %s10 = scalar_lea.sflag [#allocation3], 1
    %11 = vsyncpa %s10, 0
    loop: start=0, step=1, limit=4
    $region2: #{single_up_forward.1} parent=1 // loop_pre_header
      _
    $region3: #{single_up_forward.1} parent=1 // loop_header
      %s13 = sphi 0, %s17
      %p14 = scmp.ge.s32.totalorder %s13, 4
      %s20 = sphi 0, %s32
      %s21 = sphi 0, %s28
      %s22 = sphi 0, %s20
      %s23 = sphi 0, %s21
      %s24 = sphi 0, %s22
      %s25 = sphi 0, %s23
      %s35 = sphi 0, %s37
      %s38 = sphi 0, %s35
      %s39 = sphi 0, %s38
      %s55 = sphi 0, %s39
      %s63 = sphi 0, %s65
      %s66 = sphi 0, %s63
      %s67 = sphi 0, %s66
      %s83 = sphi 0, %s67
      %s89 = sphi 0, %s91
      %s92 = sphi 0, %s89
      %s93 = sphi 0, %s92
      %s109 = sphi 0, %s93
      %s113 = sphi 0, %s113
      %s115 = sphi 0, %s113
      %s116 = sphi 0, %s115
      %s130 = sphi 0, %s116
      %s138 = sphi 0, %s140
      %s141 = sphi 0, %s138
      %s142 = sphi 0, %s141
      %s158 = sphi 0, %s142
    $region4: #{single_up_forward.1} parent=1 // loop_header_branch
      %16 = sbr.rel (%p14) target = $region8
    $region5: #{single_up_forward.1} parent=1 // loop_body
      %s18 = ssub.s32 %s13, 1
      %s19 = ssub.s32 %s13, 2
      %s26 = sadd.s32 1, %s21
      %p27 = scmp.ge.s32.totalorder %s26, 1
      %s28 = scalar_select %p27, 0, %s26
      %s29 = sadd.s32 1, %s20
      %s30 = scalar_select %p27, %s29, %s20
      %p31 = scmp.ge.s32.totalorder %s30, 2
      %s32 = scalar_select %p31, 0, %s30
      %s33 = ssub.s32 %s20, %s32
      %p34 = scmp.eq.s32.totalorder %s33, 0
      %s36 = sadd.s32 %s35, 1
      %s37 = scalar_select %p34, %s35, %s36
      %p40 = pneg %p34
      %p41 = scmp.eq.s32.totalorder %s13, 1
      %p42 = por %p40, %p41
      %p43 = scmp.ne.s32.totalorder %s35, %s38
      %p44 = scmp.eq.s32.totalorder %s13, 0
      %p45 = por %p43, %p44
      %p46 = scmp.ne.s32.totalorder %s35, %s38
      %p47 = scmp.eq.s32.totalorder %s18, 1
      %p48 = por %p46, %p47
      %p49 = scmp.ne.s32.totalorder %s38, %s39
      %p50 = scmp.eq.s32.totalorder %s18, 0
      %p51 = por %p49, %p50
      %p52 = scmp.ne.s32.totalorder %s38, %s39
      %p53 = scmp.eq.s32.totalorder %s19, 1
      %p54 = por %p52, %p53
      %p56 = scmp.ne.s32.totalorder %s39, %s55
      %p57 = scmp.eq.s32.totalorder %s19, 0
      %p58 = por %p56, %p57
      %s59 = ssub.s32 %s20, %s32
      %s60 = ssub.s32 %s21, %s28
      %s61 = sor.u32 %s59, %s60
      %p62 = scmp.eq.s32.totalorder %s61, 0
      %s64 = sadd.s32 %s63, 1
      %s65 = scalar_select %p62, %s63, %s64
      %p68 = pneg %p62
      %p69 = scmp.eq.s32.totalorder %s13, 1
      %p70 = por %p68, %p69
      %p71 = scmp.ne.s32.totalorder %s63, %s66
      %p72 = scmp.eq.s32.totalorder %s13, 0
      %p73 = por %p71, %p72
      %p74 = scmp.ne.s32.totalorder %s63, %s66
      %p75 = scmp.eq.s32.totalorder %s18, 1
      %p76 = por %p74, %p75
      %p77 = scmp.ne.s32.totalorder %s66, %s67
      %p78 = scmp.eq.s32.totalorder %s18, 0
      %p79 = por %p77, %p78
      %p80 = scmp.ne.s32.totalorder %s66, %s67
      %p81 = scmp.eq.s32.totalorder %s19, 1
      %p82 = por %p80, %p81
      %p84 = scmp.ne.s32.totalorder %s67, %s83
      %p85 = scmp.eq.s32.totalorder %s19, 0
      %p86 = por %p84, %p85
      %s87 = ssub.s32 %s21, %s28
      %p88 = scmp.eq.s32.totalorder %s87, 0
      %s90 = sadd.s32 %s89, 1
      %s91 = scalar_select %p88, %s89, %s90
      %p94 = pneg %p88
      %p95 = scmp.eq.s32.totalorder %s13, 1
      %p96 = por %p94, %p95
      %p97 = scmp.ne.s32.totalorder %s89, %s92
      %p98 = scmp.eq.s32.totalorder %s13, 0
      %p99 = por %p97, %p98
      %p100 = scmp.ne.s32.totalorder %s89, %s92
      %p101 = scmp.eq.s32.totalorder %s18, 1
      %p102 = por %p100, %p101
      %p103 = scmp.ne.s32.totalorder %s92, %s93
      %p104 = scmp.eq.s32.totalorder %s18, 0
      %p105 = por %p103, %p104
      %p106 = scmp.ne.s32.totalorder %s92, %s93
      %p107 = scmp.eq.s32.totalorder %s19, 1
      %p108 = por %p106, %p107
      %p110 = scmp.ne.s32.totalorder %s93, %s109
      %p111 = scmp.eq.s32.totalorder %s19, 0
      %p112 = por %p110, %p111
      %s114 = sadd.s32 %s113, 1
      %p117 = scmp.eq.s32.totalorder %s13, 1
      %p118 = scmp.ne.s32.totalorder %s113, %s115
      %p119 = scmp.eq.s32.totalorder %s13, 0
      %p120 = por %p118, %p119
      %p121 = scmp.ne.s32.totalorder %s113, %s115
      %p122 = scmp.eq.s32.totalorder %s18, 1
      %p123 = por %p121, %p122
      %p124 = scmp.ne.s32.totalorder %s115, %s116
      %p125 = scmp.eq.s32.totalorder %s18, 0
      %p126 = por %p124, %p125
      %p127 = scmp.ne.s32.totalorder %s115, %s116
      %p128 = scmp.eq.s32.totalorder %s19, 1
      %p129 = por %p127, %p128
      %p131 = scmp.ne.s32.totalorder %s116, %s130
      %p132 = scmp.eq.s32.totalorder %s19, 0
      %p133 = por %p131, %p132
      %s134 = ssub.s32 %s20, %s32
      %s135 = ssub.s32 %s21, %s28
      %s136 = sor.u32 %s134, %s135
      %p137 = scmp.eq.s32.totalorder %s136, 0
      %s139 = sadd.s32 %s138, 1
      %s140 = scalar_select %p137, %s138, %s139
      %p143 = pneg %p137
      %p144 = scmp.eq.s32.totalorder %s13, 1
      %p145 = por %p143, %p144
      %p146 = scmp.ne.s32.totalorder %s138, %s141
      %p147 = scmp.eq.s32.totalorder %s13, 0
      %p148 = por %p146, %p147
      %p149 = scmp.ne.s32.totalorder %s138, %s141
      %p150 = scmp.eq.s32.totalorder %s18, 1
      %p151 = por %p149, %p150
      %p152 = scmp.ne.s32.totalorder %s141, %s142
      %p153 = scmp.eq.s32.totalorder %s18, 0
      %p154 = por %p152, %p153
      %p155 = scmp.ne.s32.totalorder %s141, %s142
      %p156 = scmp.eq.s32.totalorder %s19, 1
      %p157 = por %p155, %p156
      %p159 = scmp.ne.s32.totalorder %s142, %s158
      %p160 = scmp.eq.s32.totalorder %s19, 0
      %p161 = por %p159, %p160
      %p162 = scmp.le.s32.totalorder 1, %s13
      %p163 = scmp.lt.s32.totalorder %s13, 3
      %p164 = pnand %p162, %p163
      %p165 = pneg %p164
      // Predicated region
      $region9: #{single_up_forward.1} parent=5 // pred_check
        _
      $region10: #{single_up_forward.1} parent=5 // pred_check_branch
        %167 = sbr.rel (%p164) target = $region12
      $region11: #{single_up_forward.1} parent=5 // pred_region
        %s168 = ssub.s32 %s13, 1
        // Predicated region
        $region13: #{single_up_forward.1} parent=11 // pred_check
          %p169 = pneg %p105
        $region14: #{single_up_forward.1} parent=11 // pred_check_branch
          %171 = sbr.rel (%p169) target = $region16
        $region15: #{single_up_forward.1} parent=11 // pred_region
          %s172 = smul.u32 2, %s23
          %p173 = scmp.lt.s32.totalorder %s172, 1
          %s174 = scalar_select %p173, %s172, 1
          %s175 = smul.addr %s174, 8
          %s176 = scalar_lea.vmem %s2, %s175
          %s177 = smul.u32 2, %s23
        $region16: #{single_up_forward.1} parent=11 // pred_fallthru
          _
        // Predicated region
        $region17: #{single_up_forward.1} parent=11 // pred_check
          %p178 = pneg %p126
        $region18: #{single_up_forward.1} parent=11 // pred_check_branch
          %180 = sbr.rel (%p178) target = $region20
        $region19: #{single_up_forward.1} parent=11 // pred_region
          _
        $region20: #{single_up_forward.1} parent=11 // pred_fallthru
          _
      $region12: #{single_up_forward.1} parent=5 // pred_fallthru
        _
      %p181 = scmp.lt.s32.totalorder %s13, 2
      // Predicated region
      $region21: #{single_up_forward.1} parent=5 // pred_check
        %p182 = pneg %p181
      $region22: #{single_up_forward.1} parent=5 // pred_check_branch
        %184 = sbr.rel (%p182) target = $region24
      $region23: #{single_up_forward.1} parent=5 // pred_region
        // Predicated region
        $region25: #{single_up_forward.1} parent=23 // pred_check
          %p185 = pneg %p45
        $region26: #{single_up_forward.1} parent=23 // pred_check_branch
          %187 = sbr.rel (%p185) target = $region28
        $region27: #{single_up_forward.1} parent=23 // pred_region
          %p188 = scmp.lt.s32.totalorder %s20, 1
          %s189 = scalar_select %p188, %s20, 1
          %s190 = smul.addr %s189, 4
          %s191 = smul.addr %s190, 8
          %s192 = scalar_lea.vmem %s0, %s191
        $region28: #{single_up_forward.1} parent=23 // pred_fallthru
          _
        // Predicated region
        $region29: #{single_up_forward.1} parent=23 // pred_check
          %p193 = pneg %p73
        $region30: #{single_up_forward.1} parent=23 // pred_check_branch
          %195 = sbr.rel (%p193) target = $region32
        $region31: #{single_up_forward.1} parent=23 // pred_region
          %s196 = smul.u32 2, %s21
          %p197 = scmp.lt.s32.totalorder %s20, 1
          %s198 = scalar_select %p197, %s20, 1
          %p199 = scmp.lt.s32.totalorder %s196, 1
          %s200 = scalar_select %p199, %s196, 1
          %s201 = smul.addr %s198, 8
          %s202 = sadd.s32 %s200, %s201
          %s203 = smul.addr %s202, 8
          %s204 = scalar_lea.vmem %s1, %s203
          %s205 = smul.u32 2, %s21
        $region32: #{single_up_forward.1} parent=23 // pred_fallthru
          _
      $region24: #{single_up_forward.1} parent=5 // pred_fallthru
        _
      %p206 = scmp.le.s32.totalorder 1, %s13
      %p207 = scmp.lt.s32.totalorder %s13, 3
      %p208 = pnand %p206, %p207
      %p209 = pneg %p208
      // Predicated region
      $region33: #{single_up_forward.1} parent=5 // pred_check
        _
      $region34: #{single_up_forward.1} parent=5 // pred_check_branch
        %211 = sbr.rel (%p208) target = $region36
      $region35: #{single_up_forward.1} parent=5 // pred_region
        %s212 = ssub.s32 %s13, 1
        %p213 = scmp.lt.s32.totalorder %s22, 1
        %s214 = scalar_select %p213, %s22, 1
        %s215 = smul.addr %s214, 4
        %s216 = smul.addr %s215, 8
        %s217 = scalar_lea.vmem %s0, %s216
        %p218 = pneg %p51
        %p219 = pneg %p48
        %s220 = smul.u32 2, %s23
        %p221 = scmp.lt.s32.totalorder %s22, 1
        %s222 = scalar_select %p221, %s22, 1
        %p223 = scmp.lt.s32.totalorder %s220, 1
        %s224 = scalar_select %p223, %s220, 1
        %s225 = smul.addr %s222, 8
        %s226 = sadd.s32 %s224, %s225
        %s227 = smul.addr %s226, 8
        %s228 = scalar_lea.vmem %s1, %s227
        %p229 = pneg %p79
        %p230 = pneg %p76
        %s231 = smul.u32 2, %s23
        %p232 = scmp.lt.s32.totalorder %s231, 1
        %s233 = scalar_select %p232, %s231, 1
        %s234 = smul.addr %s233, 8
        %s235 = scalar_lea.vmem %s2, %s234
        %p236 = pneg %p105
        %p237 = pneg %p102
        %p238 = pneg %p126
        %p239 = pneg %p123
        %p240 = pneg %p154
        %p241 = pneg %p151
        %s242 = sand.u32 %s141, 1
        %s243 = scalar_lea.sflag [#allocation3], %s242
        %s244 = sand.u32 %s141, 1
        %s245 = smul.addr %s244, 128
        %s246 = scalar_lea.vmem [#allocation2], %s245
        %p247 = scmp.lt.s32.totalorder %s22, 1
        %s248 = scalar_select %p247, %s22, 1
        %s249 = smul.addr %s248, 4
        %s250 = smul.addr %s249, 8
        %s251 = scalar_lea.vmem %s0, %s250
        %s252 = smul.u32 2, %s23
        %p253 = scmp.lt.s32.totalorder %s22, 1
        %s254 = scalar_select %p253, %s22, 1
        %p255 = scmp.lt.s32.totalorder %s252, 1
        %s256 = scalar_select %p255, %s252, 1
        %s257 = smul.addr %s254, 8
        %s258 = sadd.s32 %s256, %s257
        %s259 = smul.addr %s258, 8
        %s260 = scalar_lea.vmem %s1, %s259
        %s261 = smul.u32 2, %s23
        %s262 = smul.u32 2, %s23
        %p263 = scmp.lt.s32.totalorder %s262, 1
        %s264 = scalar_select %p263, %s262, 1
        %s265 = smul.addr %s264, 8
        %s266 = scalar_lea.vmem %s2, %s265
        %s267 = smul.u32 2, %s23
        %s268 = smul.u32 2, %s23
        %v269 = vld [vmem:[%s251] sm:$0xff]
        %v270 = vld [vmem:[%s251 + $0x8] sm:$0xff]
        %v271 = vld [vmem:[%s251 + $0x10] sm:$0xff]
        %v272 = vld [vmem:[%s251 + $0x18] sm:$0xff]
        %v273 = vld [vmem:[%s3] sm:$0xff]
        %vm274 = vcmask 64512
        %v276 = vsel %vm274, %v269, 0
        %v279 = vsel %vm274, %v270, 0
        %v282 = vsel %vm274, %v271, 0
        %v285 = vsel %vm274, %v272, 0
        %287 = vmatprep.subr.mxu0 0.0
        %288 = vmatpush1.msra.mxu0 0.0
        %289 = vmatprep.subr.mxu0 0.0
        %290 = vmatpush1.msra.mxu0 0.0
        %291 = vmatprep.subr.mxu0 0.0
        %292 = vmatpush1.msra.mxu0 0.0
        %293 = vmatprep.subr.mxu0 0.0
        %294 = vmatpush1.msra.mxu0 0.0
        %295 = vmatprep.subr.mxu0 0.0
        %296 = vmatpush1.msra.mxu0 0.0
        %297 = vmatprep.subr.mxu0 0.0
        %298 = vmatpush1.msra.mxu0 0.0
        %299 = vmatprep.subr.mxu0 0.0
        %300 = vmatpush1.msra.mxu0 0.0
        %301 = vmatprep.subr.mxu0 0.0
        %302 = vmatpush1.msra.mxu0 0.0
        %303 = vmatprep.subr.mxu0 0.0
        %304 = vmatpush1.msra.mxu0 0.0
        %305 = vmatprep.subr.mxu0 0.0
        %306 = vmatpush1.msra.mxu0 0.0
        %307 = vmatprep.subr.mxu0 0.0
        %308 = vmatpush1.msra.mxu0 0.0
        %309 = vmatprep.subr.mxu0 0.0
        %310 = vmatpush1.msra.mxu0 0.0
        %311 = vmatprep.subr.mxu0 0.0
        %312 = vmatpush1.msra.mxu0 0.0
        %313 = vmatprep.subr.mxu0 0.0
        %314 = vmatpush1.msra.mxu0 0.0
        %315 = vmatprep.subr.mxu0 0.0
        %316 = vmatpush1.msra.mxu0 0.0
        %317 = vmatprep.subr.mxu0 0.0
        %318 = vmatpush1.msra.mxu0 %v273
        %319 = vmatprep.subr.mxu0 0.0
        %320 = vmatpush2.msra.mxu0 0.0
        %321 = vmatprep.subr.mxu0 0.0
        %322 = vmatpush2.msra.mxu0 0.0
        %323 = vmatprep.subr.mxu0 0.0
        %324 = vmatpush2.msra.mxu0 0.0
        %325 = vmatprep.subr.mxu0 0.0
        %326 = vmatpush2.msra.mxu0 0.0
        %327 = vmatprep.subr.mxu0 0.0
        %328 = vmatpush2.msra.mxu0 0.0
        %329 = vmatprep.subr.mxu0 0.0
        %330 = vmatpush2.msra.mxu0 0.0
        %331 = vmatprep.subr.mxu0 0.0
        %332 = vmatpush2.msra.mxu0 0.0
        %333 = vmatprep.subr.mxu0 0.0
        %334 = vmatpush2.msra.mxu0 0.0
        %335 = vmatprep.subr.mxu0 0.0
        %336 = vmatpush2.msra.mxu0 0.0
        %337 = vmatprep.subr.mxu0 0.0
        %338 = vmatpush2.msra.mxu0 0.0
        %339 = vmatprep.subr.mxu0 0.0
        %340 = vmatpush2.msra.mxu0 0.0
        %341 = vmatprep.subr.mxu0 0.0
        %342 = vmatpush2.msra.mxu0 0.0
        %343 = vmatprep.subr.mxu0 0.0
        %344 = vmatpush2.msra.mxu0 0.0
        %345 = vmatprep.subr.mxu0 0.0
        %346 = vmatpush2.msra.mxu0 0.0
        %347 = vmatprep.subr.mxu0 0.0
        %348 = vmatpush2.msra.mxu0 0.0
        %349 = vmatprep.subr.mxu0 0.0
        %350 = vmatpush2.msra.mxu0 0.0
        %351 = vmatprep.mubr.f32.mxu0 0.0
        %352 = vmatmul.mubr.f32.gmra.mxu0 %v276
        %v353 = vpop.f32.mrf.mxu0
        %v354 = vadd.f32 0.0, %v353
        %v355 = vpop.f32.mrf.mxu0
        %356 = vmatprep.mubr.f32.mxu0 0.0
        %357 = vmatmul.mubr.f32.gmra.mxu0 %v279
        %v358 = vpop.f32.mrf.mxu0
        %v359 = vadd.f32 0.0, %v358
        %v360 = vpop.f32.mrf.mxu0
        %361 = vmatprep.mubr.f32.mxu0 0.0
        %362 = vmatmul.mubr.f32.gmra.mxu0 %v282
        %v363 = vpop.f32.mrf.mxu0
        %v364 = vadd.f32 0.0, %v363
        %v365 = vpop.f32.mrf.mxu0
        %366 = vmatprep.mubr.f32.mxu0 0.0
        %367 = vmatmul.mubr.f32.gmra.mxu0 %v285
        %v368 = vpop.f32.mrf.mxu0
        %v369 = vadd.f32 0.0, %v368
        %v370 = vpop.f32.mrf.mxu0
        %371 = vdwg.mxu0
        %v372 = vld [vmem:[%s266] sm:$0xff]
        %v373 = vld [vmem:[%s266 + $0x8] sm:$0xff]
        %v375 = vsel %vm274, %v372, 0
        %v378 = vsel %vm274, %v373, 0
        %380 = vmatprep.subr.mxu0 0.0
        %381 = vmatpush1.msra.mxu0 0.0
        %382 = vmatprep.subr.mxu0 0.0
        %383 = vmatpush1.msra.mxu0 0.0
        %384 = vmatprep.subr.mxu0 0.0
        %385 = vmatpush1.msra.mxu0 0.0
        %386 = vmatprep.subr.mxu0 0.0
        %387 = vmatpush1.msra.mxu0 0.0
        %388 = vmatprep.subr.mxu0 0.0
        %389 = vmatpush1.msra.mxu0 0.0
        %390 = vmatprep.subr.mxu0 0.0
        %391 = vmatpush1.msra.mxu0 0.0
        %392 = vmatprep.subr.mxu0 0.0
        %393 = vmatpush1.msra.mxu0 0.0
        %394 = vmatprep.subr.mxu0 0.0
        %395 = vmatpush1.msra.mxu0 0.0
        %396 = vmatprep.subr.mxu0 0.0
        %397 = vmatpush1.msra.mxu0 0.0
        %398 = vmatprep.subr.mxu0 0.0
        %399 = vmatpush1.msra.mxu0 0.0
        %400 = vmatprep.subr.mxu0 0.0
        %401 = vmatpush1.msra.mxu0 0.0
        %402 = vmatprep.subr.mxu0 0.0
        %403 = vmatpush1.msra.mxu0 0.0
        %404 = vmatprep.subr.mxu0 0.0
        %405 = vmatpush1.msra.mxu0 0.0
        %406 = vmatprep.subr.mxu0 0.0
        %407 = vmatpush1.msra.mxu0 0.0
        %408 = vmatprep.subr.mxu0 0.0
        %409 = vmatpush1.msra.mxu0 0.0
        %410 = vmatprep.subr.mxu0 0.0
        %411 = vmatpush1.msra.mxu0 %v354
        %412 = vmatprep.subr.mxu0 0.0
        %413 = vmatpush2.msra.mxu0 0.0
        %414 = vmatprep.subr.mxu0 0.0
        %415 = vmatpush2.msra.mxu0 0.0
        %416 = vmatprep.subr.mxu0 0.0
        %417 = vmatpush2.msra.mxu0 0.0
        %418 = vmatprep.subr.mxu0 0.0
        %419 = vmatpush2.msra.mxu0 0.0
        %420 = vmatprep.subr.mxu0 0.0
        %421 = vmatpush2.msra.mxu0 0.0
        %422 = vmatprep.subr.mxu0 0.0
        %423 = vmatpush2.msra.mxu0 0.0
        %424 = vmatprep.subr.mxu0 0.0
        %425 = vmatpush2.msra.mxu0 0.0
        %426 = vmatprep.subr.mxu0 0.0
        %427 = vmatpush2.msra.mxu0 0.0
        %428 = vmatprep.subr.mxu0 0.0
        %429 = vmatpush2.msra.mxu0 0.0
        %430 = vmatprep.subr.mxu0 0.0
        %431 = vmatpush2.msra.mxu0 0.0
        %432 = vmatprep.subr.mxu0 0.0
        %433 = vmatpush2.msra.mxu0 0.0
        %434 = vmatprep.subr.mxu0 0.0
        %435 = vmatpush2.msra.mxu0 0.0
        %436 = vmatprep.subr.mxu0 0.0
        %437 = vmatpush2.msra.mxu0 0.0
        %438 = vmatprep.subr.mxu0 0.0
        %439 = vmatpush2.msra.mxu0 0.0
        %440 = vmatprep.subr.mxu0 0.0
        %441 = vmatpush2.msra.mxu0 0.0
        %442 = vmatprep.subr.mxu0 0.0
        %443 = vmatpush2.msra.mxu0 0.0
        %444 = vmatprep.mubr.f32.mxu0 0.0
        %445 = vmatmul.mubr.f32.gmra.mxu0 %v375
        %v446 = vpop.f32.mrf.mxu0
        %v447 = vadd.f32 0.0, %v446
        %v448 = vpop.f32.mrf.mxu0
        %449 = vmatprep.mubr.f32.mxu0 0.0
        %450 = vmatmul.mubr.f32.gmra.mxu0 %v378
        %v451 = vpop.f32.mrf.mxu0
        %v452 = vadd.f32 0.0, %v451
        %v453 = vpop.f32.mrf.mxu0
        %454 = vdwg.mxu0
        %455 = vmatprep.subr.mxu0 0.0
        %456 = vmatpush1.msra.mxu0 0.0
        %457 = vmatprep.subr.mxu0 0.0
        %458 = vmatpush1.msra.mxu0 0.0
        %459 = vmatprep.subr.mxu0 0.0
        %460 = vmatpush1.msra.mxu0 0.0
        %461 = vmatprep.subr.mxu0 0.0
        %462 = vmatpush1.msra.mxu0 0.0
        %463 = vmatprep.subr.mxu0 0.0
        %464 = vmatpush1.msra.mxu0 0.0
        %465 = vmatprep.subr.mxu0 0.0
        %466 = vmatpush1.msra.mxu0 0.0
        %467 = vmatprep.subr.mxu0 0.0
        %468 = vmatpush1.msra.mxu0 0.0
        %469 = vmatprep.subr.mxu0 0.0
        %470 = vmatpush1.msra.mxu0 0.0
        %471 = vmatprep.subr.mxu0 0.0
        %472 = vmatpush1.msra.mxu0 0.0
        %473 = vmatprep.subr.mxu0 0.0
        %474 = vmatpush1.msra.mxu0 0.0
        %475 = vmatprep.subr.mxu0 0.0
        %476 = vmatpush1.msra.mxu0 0.0
        %477 = vmatprep.subr.mxu0 0.0
        %478 = vmatpush1.msra.mxu0 0.0
        %479 = vmatprep.subr.mxu0 0.0
        %480 = vmatpush1.msra.mxu0 0.0
        %481 = vmatprep.subr.mxu0 0.0
        %482 = vmatpush1.msra.mxu0 0.0
        %483 = vmatprep.subr.mxu0 0.0
        %484 = vmatpush1.msra.mxu0 0.0
        %485 = vmatprep.subr.mxu0 0.0
        %486 = vmatpush1.msra.mxu0 %v359
        %487 = vmatprep.subr.mxu0 0.0
        %488 = vmatpush2.msra.mxu0 0.0
        %489 = vmatprep.subr.mxu0 0.0
        %490 = vmatpush2.msra.mxu0 0.0
        %491 = vmatprep.subr.mxu0 0.0
        %492 = vmatpush2.msra.mxu0 0.0
        %493 = vmatprep.subr.mxu0 0.0
        %494 = vmatpush2.msra.mxu0 0.0
        %495 = vmatprep.subr.mxu0 0.0
        %496 = vmatpush2.msra.mxu0 0.0
        %497 = vmatprep.subr.mxu0 0.0
        %498 = vmatpush2.msra.mxu0 0.0
        %499 = vmatprep.subr.mxu0 0.0
        %500 = vmatpush2.msra.mxu0 0.0
        %501 = vmatprep.subr.mxu0 0.0
        %502 = vmatpush2.msra.mxu0 0.0
        %503 = vmatprep.subr.mxu0 0.0
        %504 = vmatpush2.msra.mxu0 0.0
        %505 = vmatprep.subr.mxu0 0.0
        %506 = vmatpush2.msra.mxu0 0.0
        %507 = vmatprep.subr.mxu0 0.0
        %508 = vmatpush2.msra.mxu0 0.0
        %509 = vmatprep.subr.mxu0 0.0
        %510 = vmatpush2.msra.mxu0 0.0
        %511 = vmatprep.subr.mxu0 0.0
        %512 = vmatpush2.msra.mxu0 0.0
        %513 = vmatprep.subr.mxu0 0.0
        %514 = vmatpush2.msra.mxu0 0.0
        %515 = vmatprep.subr.mxu0 0.0
        %516 = vmatpush2.msra.mxu0 0.0
        %517 = vmatprep.subr.mxu0 0.0
        %518 = vmatpush2.msra.mxu0 0.0
        %519 = vmatprep.mubr.f32.mxu0 0.0
        %520 = vmatmul.mubr.f32.gmra.mxu0 %v375
        %v521 = vpop.f32.mrf.mxu0
        %v522 = vadd.f32 0.0, %v521
        %v523 = vpop.f32.mrf.mxu0
        %524 = vmatprep.mubr.f32.mxu0 0.0
        %525 = vmatmul.mubr.f32.gmra.mxu0 %v378
        %v526 = vpop.f32.mrf.mxu0
        %v527 = vadd.f32 0.0, %v526
        %v528 = vpop.f32.mrf.mxu0
        %529 = vdwg.mxu0
        %530 = vmatprep.subr.mxu0 0.0
        %531 = vmatpush1.msra.mxu0 0.0
        %532 = vmatprep.subr.mxu0 0.0
        %533 = vmatpush1.msra.mxu0 0.0
        %534 = vmatprep.subr.mxu0 0.0
        %535 = vmatpush1.msra.mxu0 0.0
        %536 = vmatprep.subr.mxu0 0.0
        %537 = vmatpush1.msra.mxu0 0.0
        %538 = vmatprep.subr.mxu0 0.0
        %539 = vmatpush1.msra.mxu0 0.0
        %540 = vmatprep.subr.mxu0 0.0
        %541 = vmatpush1.msra.mxu0 0.0
        %542 = vmatprep.subr.mxu0 0.0
        %543 = vmatpush1.msra.mxu0 0.0
        %544 = vmatprep.subr.mxu0 0.0
        %545 = vmatpush1.msra.mxu0 0.0
        %546 = vmatprep.subr.mxu0 0.0
        %547 = vmatpush1.msra.mxu0 0.0
        %548 = vmatprep.subr.mxu0 0.0
        %549 = vmatpush1.msra.mxu0 0.0
        %550 = vmatprep.subr.mxu0 0.0
        %551 = vmatpush1.msra.mxu0 0.0
        %552 = vmatprep.subr.mxu0 0.0
        %553 = vmatpush1.msra.mxu0 0.0
        %554 = vmatprep.subr.mxu0 0.0
        %555 = vmatpush1.msra.mxu0 0.0
        %556 = vmatprep.subr.mxu0 0.0
        %557 = vmatpush1.msra.mxu0 0.0
        %558 = vmatprep.subr.mxu0 0.0
        %559 = vmatpush1.msra.mxu0 0.0
        %560 = vmatprep.subr.mxu0 0.0
        %561 = vmatpush1.msra.mxu0 %v364
        %562 = vmatprep.subr.mxu0 0.0
        %563 = vmatpush2.msra.mxu0 0.0
        %564 = vmatprep.subr.mxu0 0.0
        %565 = vmatpush2.msra.mxu0 0.0
        %566 = vmatprep.subr.mxu0 0.0
        %567 = vmatpush2.msra.mxu0 0.0
        %568 = vmatprep.subr.mxu0 0.0
        %569 = vmatpush2.msra.mxu0 0.0
        %570 = vmatprep.subr.mxu0 0.0
        %571 = vmatpush2.msra.mxu0 0.0
        %572 = vmatprep.subr.mxu0 0.0
        %573 = vmatpush2.msra.mxu0 0.0
        %574 = vmatprep.subr.mxu0 0.0
        %575 = vmatpush2.msra.mxu0 0.0
        %576 = vmatprep.subr.mxu0 0.0
        %577 = vmatpush2.msra.mxu0 0.0
        %578 = vmatprep.subr.mxu0 0.0
        %579 = vmatpush2.msra.mxu0 0.0
        %580 = vmatprep.subr.mxu0 0.0
        %581 = vmatpush2.msra.mxu0 0.0
        %582 = vmatprep.subr.mxu0 0.0
        %583 = vmatpush2.msra.mxu0 0.0
        %584 = vmatprep.subr.mxu0 0.0
        %585 = vmatpush2.msra.mxu0 0.0
        %586 = vmatprep.subr.mxu0 0.0
        %587 = vmatpush2.msra.mxu0 0.0
        %588 = vmatprep.subr.mxu0 0.0
        %589 = vmatpush2.msra.mxu0 0.0
        %590 = vmatprep.subr.mxu0 0.0
        %591 = vmatpush2.msra.mxu0 0.0
        %592 = vmatprep.subr.mxu0 0.0
        %593 = vmatpush2.msra.mxu0 0.0
        %594 = vmatprep.mubr.f32.mxu0 0.0
        %595 = vmatmul.mubr.f32.gmra.mxu0 %v375
        %v596 = vpop.f32.mrf.mxu0
        %v597 = vadd.f32 0.0, %v596
        %v598 = vpop.f32.mrf.mxu0
        %599 = vmatprep.mubr.f32.mxu0 0.0
        %600 = vmatmul.mubr.f32.gmra.mxu0 %v378
        %v601 = vpop.f32.mrf.mxu0
        %v602 = vadd.f32 0.0, %v601
        %v603 = vpop.f32.mrf.mxu0
        %604 = vdwg.mxu0
        %605 = vmatprep.subr.mxu0 0.0
        %606 = vmatpush1.msra.mxu0 0.0
        %607 = vmatprep.subr.mxu0 0.0
        %608 = vmatpush1.msra.mxu0 0.0
        %609 = vmatprep.subr.mxu0 0.0
        %610 = vmatpush1.msra.mxu0 0.0
        %611 = vmatprep.subr.mxu0 0.0
        %612 = vmatpush1.msra.mxu0 0.0
        %613 = vmatprep.subr.mxu0 0.0
        %614 = vmatpush1.msra.mxu0 0.0
        %615 = vmatprep.subr.mxu0 0.0
        %616 = vmatpush1.msra.mxu0 0.0
        %617 = vmatprep.subr.mxu0 0.0
        %618 = vmatpush1.msra.mxu0 0.0
        %619 = vmatprep.subr.mxu0 0.0
        %620 = vmatpush1.msra.mxu0 0.0
        %621 = vmatprep.subr.mxu0 0.0
        %622 = vmatpush1.msra.mxu0 0.0
        %623 = vmatprep.subr.mxu0 0.0
        %624 = vmatpush1.msra.mxu0 0.0
        %625 = vmatprep.subr.mxu0 0.0
        %626 = vmatpush1.msra.mxu0 0.0
        %627 = vmatprep.subr.mxu0 0.0
        %628 = vmatpush1.msra.mxu0 0.0
        %629 = vmatprep.subr.mxu0 0.0
        %630 = vmatpush1.msra.mxu0 0.0
        %631 = vmatprep.subr.mxu0 0.0
        %632 = vmatpush1.msra.mxu0 0.0
        %633 = vmatprep.subr.mxu0 0.0
        %634 = vmatpush1.msra.mxu0 0.0
        %635 = vmatprep.subr.mxu0 0.0
        %636 = vmatpush1.msra.mxu0 %v369
        %637 = vmatprep.subr.mxu0 0.0
        %638 = vmatpush2.msra.mxu0 0.0
        %639 = vmatprep.subr.mxu0 0.0
        %640 = vmatpush2.msra.mxu0 0.0
        %641 = vmatprep.subr.mxu0 0.0
        %642 = vmatpush2.msra.mxu0 0.0
        %643 = vmatprep.subr.mxu0 0.0
        %644 = vmatpush2.msra.mxu0 0.0
        %645 = vmatprep.subr.mxu0 0.0
        %646 = vmatpush2.msra.mxu0 0.0
        %647 = vmatprep.subr.mxu0 0.0
        %648 = vmatpush2.msra.mxu0 0.0
        %649 = vmatprep.subr.mxu0 0.0
        %650 = vmatpush2.msra.mxu0 0.0
        %651 = vmatprep.subr.mxu0 0.0
        %652 = vmatpush2.msra.mxu0 0.0
        %653 = vmatprep.subr.mxu0 0.0
        %654 = vmatpush2.msra.mxu0 0.0
        %655 = vmatprep.subr.mxu0 0.0
        %656 = vmatpush2.msra.mxu0 0.0
        %657 = vmatprep.subr.mxu0 0.0
        %658 = vmatpush2.msra.mxu0 0.0
        %659 = vmatprep.subr.mxu0 0.0
        %660 = vmatpush2.msra.mxu0 0.0
        %661 = vmatprep.subr.mxu0 0.0
        %662 = vmatpush2.msra.mxu0 0.0
        %663 = vmatprep.subr.mxu0 0.0
        %664 = vmatpush2.msra.mxu0 0.0
        %665 = vmatprep.subr.mxu0 0.0
        %666 = vmatpush2.msra.mxu0 0.0
        %667 = vmatprep.subr.mxu0 0.0
        %668 = vmatpush2.msra.mxu0 0.0
        %669 = vmatprep.mubr.f32.mxu0 0.0
        %670 = vmatmul.mubr.f32.gmra.mxu0 %v375
        %v671 = vpop.f32.mrf.mxu0
        %v672 = vadd.f32 0.0, %v671
        %v673 = vpop.f32.mrf.mxu0
        %674 = vmatprep.mubr.f32.mxu0 0.0
        %675 = vmatmul.mubr.f32.gmra.mxu0 %v378
        %v676 = vpop.f32.mrf.mxu0
        %v677 = vadd.f32 0.0, %v676
        %v678 = vpop.f32.mrf.mxu0
        %679 = vdwg.mxu0
        %v680 = vld [vmem:[%s260] sm:$0xff]
        %v681 = vld [vmem:[%s260 + $0x8] sm:$0xff]
        %v682 = vld [vmem:[%s260 + $0x10] sm:$0xff]
        %v683 = vld [vmem:[%s260 + $0x18] sm:$0xff]
        %v684 = vld [vmem:[%s260 + $0x20] sm:$0xff]
        %v685 = vld [vmem:[%s260 + $0x28] sm:$0xff]
        %v686 = vld [vmem:[%s260 + $0x30] sm:$0xff]
        %v687 = vld [vmem:[%s260 + $0x38] sm:$0xff]
        %vm688 = vcmask 130048
        %689 = vst.msk [vmem:[%s246] sm:$0xff] %vm688, %v680
        %690 = vst.msk [vmem:[%s246 + $0x8] sm:$0xff] %vm688, %v681
        %691 = vst.msk [vmem:[%s246 + $0x10] sm:$0xff] %vm688, %v682
        %692 = vst.msk [vmem:[%s246 + $0x18] sm:$0xff] %vm688, %v683
        %693 = vst.msk [vmem:[%s246 + $0x20] sm:$0xff] %vm688, %v684
        %694 = vst.msk [vmem:[%s246 + $0x28] sm:$0xff] %vm688, %v685
        %695 = vst.msk [vmem:[%s246 + $0x30] sm:$0xff] %vm688, %v686
        %696 = vst.msk [vmem:[%s246 + $0x38] sm:$0xff] %vm688, %v687
        %s697 = scalar_lea.vmem %s246, 64 [#allocation2]
        %698 = vst.msk [vmem:[%s697] sm:$0xff] %vm688, %v447
        %699 = vst.msk [vmem:[%s697 + $0x8] sm:$0xff] %vm688, %v452
        %700 = vst.msk [vmem:[%s697 + $0x10] sm:$0xff] %vm688, %v522
        %701 = vst.msk [vmem:[%s697 + $0x18] sm:$0xff] %vm688, %v527
        %702 = vst.msk [vmem:[%s697 + $0x20] sm:$0xff] %vm688, %v597
        %703 = vst.msk [vmem:[%s697 + $0x28] sm:$0xff] %vm688, %v602
        %704 = vst.msk [vmem:[%s697 + $0x30] sm:$0xff] %vm688, %v672
        %705 = vst.msk [vmem:[%s697 + $0x38] sm:$0xff] %vm688, %v677
        %s706 = sand.u32 %s141, 1
        %s707 = scalar_lea.sflag [#allocation3], %s706
        %s708 = sand.u32 %s141, 1
        %s709 = smul.addr %s708, 128
        %s710 = scalar_lea.vmem [#allocation2], %s709
        // Predicated region
        $region37: #{single_up_forward.1} parent=35 // pred_check
          %p711 = pneg %p151
        $region38: #{single_up_forward.1} parent=35 // pred_check_branch
          %713 = sbr.rel (%p711) target = $region40
        $region39: #{single_up_forward.1} parent=35 // pred_region
          %s714 = smul.u32 2, %s23
          %s716 = ssub.s32 2048, 2048
          %717 = vsyncadd %s707, %s716
          %s718 = smul.addr %s22, 16
          %s719 = sadd.s32 %s714, %s718
          %s720 = smul.addr %s719, 128
          %s721 = scalar_lea.hbm %s4, %s720
          %s722 = sshll.u32 %s710, 4
          %s723 = int_to_ptr.vmem [resolvable:$true] %s722
          %728 = dma.vmem_to_hbm [thread:$0]  %s723, 2048, %s721, %s707, 128, 128, 8
        $region40: #{single_up_forward.1} parent=35 // pred_fallthru
          _
      $region36: #{single_up_forward.1} parent=5 // pred_fallthru
        _
      %p729 = scmp.le.s32.totalorder 2, %s13
      // Predicated region
      $region41: #{single_up_forward.1} parent=5 // pred_check
        %p730 = pneg %p729
      $region42: #{single_up_forward.1} parent=5 // pred_check_branch
        %732 = sbr.rel (%p730) target = $region44
      $region43: #{single_up_forward.1} parent=5 // pred_region
        %s733 = ssub.s32 %s13, 2
        // Predicated region
        $region45: #{single_up_forward.1} parent=43 // pred_check
          %p734 = pneg %p157
        $region46: #{single_up_forward.1} parent=43 // pred_check_branch
          %736 = sbr.rel (%p734) target = $region48
        $region47: #{single_up_forward.1} parent=43 // pred_region
          %s737 = sand.u32 %s142, 1
          %s738 = scalar_lea.sflag [#allocation3], %s737
          %s739 = sand.u32 %s142, 1
          %s740 = smul.addr %s739, 128
          %s741 = scalar_lea.vmem [#allocation2], %s740
          %742 = dma.done %s738, 2048
        $region48: #{single_up_forward.1} parent=43 // pred_fallthru
          _
      $region44: #{single_up_forward.1} parent=5 // pred_fallthru
        _
    $region6: #{single_up_forward.1} parent=1 // loop_footer
      %s17 = sadd.s32 1, %s13
    $region7: #{single_up_forward.1} parent=1 // loop_footer_branch
      %12 = sbr.rel target = $region3
    $region8: #{single_up_forward.1} parent=1 // loop_exit
      _
    %743 = vsyncpa [#allocation3], 1
    %s744 = scalar_lea.sflag [#allocation3], 1
    %745 = vsyncpa %s744, 1

</llo_original>
